<compile_context>
chip_gen: v5e
topology: v5e:2x2
jax: 0.10.0
libtpu: 0.0.40
codegen_flags: <defaults>
</compile_context>

<pallas_src>
import jax
import jax.numpy as jnp
from jax.experimental import pallas as pl
from jax.experimental.pallas import tpu as pltpu

HIDDEN = 128
LANE = 128
SUBLANE = 8


def _round_up(x, m):
    return (x + m - 1) // m * m


def _pick_batch_tile():
    """Choose the batch tile per chip generation (VMEM-gated)."""
    try:
        info = pltpu.get_tpu_info()
        vmem = getattr(info, "vmem_capacity_bytes", 64 * 1024 * 1024)
    except Exception:  # CPU interpret / unknown platform fallback
        vmem = 64 * 1024 * 1024
    # v5e / v6e: 128 MiB VMEM -> bigger tiles amortize per-step overhead.
    # v7x: 64 MiB VMEM -> keep the tile smaller to avoid pressure.
    return 1024 if vmem >= 100 * 1024 * 1024 else 512


def mlp_kernel(x_ref, w1_ref, w2_ref, b2_ref, o_ref):
    # Layer 1: Linear(D_in -> 128), no bias.  bf16 operands, f32 accumulation (MXU).
    h = jnp.dot(x_ref[...], w1_ref[...], preferred_element_type=jnp.float32)
    # ReLU in f32 (VPU).
    h = jnp.maximum(h, 0.0)
    # Dropout(0.5): eval-mode identity (see TODO at top for the training path).
    # Layer 2: Linear(128 -> D_out) + bias.  Cast back to bf16 for the MXU feed.
    out = jnp.dot(h.astype(w2_ref.dtype), w2_ref[...],
                  preferred_element_type=jnp.float32)
    out = out + b2_ref[...]          # (1, N_pad) f32 bias broadcast — cheap VPU filler
    o_ref[...] = out.astype(o_ref.dtype)


def my_model_forward(x, w1, w2, b2):
    """x: (B, D_in) f32; w1: (D_in, 128); w2: (128, D_out); b2: (1, D_out)."""
    B, D_in = x.shape
    D_out = w2.shape[1]

    # Lane-dense padding of the feature dims (zero padding is numerically exact).
    K_pad = _round_up(D_in, LANE)
    N_pad = _round_up(D_out, LANE)

    # Batch tiling: TB multiple of 8, B padded to a multiple of TB.
    tb_target = _pick_batch_tile()
    TB = min(tb_target, _round_up(B, SUBLANE))
    B_pad = _round_up(B, TB)
    n_steps = B_pad // TB

    # Pad + cast operands.  Matmul inputs -> bf16; bias stays f32 for the epilogue.
    x_p = jnp.pad(x, ((0, B_pad - B), (0, K_pad - D_in))).astype(jnp.bfloat16)
    w1_p = jnp.pad(w1, ((0, K_pad - D_in), (0, 0))).astype(jnp.bfloat16)
    w2_p = jnp.pad(w2, ((0, 0), (0, N_pad - D_out))).astype(jnp.bfloat16)
    b2_p = jnp.pad(b2, ((0, 0), (0, N_pad - D_out))).astype(jnp.float32)

    # VMEM estimate: double-buffered x/out tiles + resident weights/bias.
    x_tile_b = TB * K_pad * 2
    o_tile_b = TB * N_pad * 4
    w_b = K_pad * HIDDEN * 2 + HIDDEN * N_pad * 2 + SUBLANE * N_pad * 4
    vmem_est = 2 * (x_tile_b + o_tile_b) + w_b
    vmem_limit = None
    if vmem_est > 24 * 1024 * 1024:
        vmem_limit = int(min(2 * vmem_est, 100 * 1024 * 1024))

    cost = pl.CostEstimate(
        flops=2 * B_pad * (K_pad * HIDDEN + HIDDEN * N_pad),
        transcendentals=0,
        bytes_accessed=(x_p.size * 2 + w1_p.size * 2 + w2_p.size * 2
                        + b2_p.size * 4 + B_pad * N_pad * 4),
    )

    grid_spec = pl.GridSpec(
        grid=(n_steps,),
        in_specs=[
            pl.BlockSpec((TB, K_pad), lambda i: (i, 0)),       # x tile, pipelined
            pl.BlockSpec((K_pad, HIDDEN), lambda i: (0, 0)),   # w1, VMEM-resident
            pl.BlockSpec((HIDDEN, N_pad), lambda i: (0, 0)),   # w2, VMEM-resident
            pl.BlockSpec((1, N_pad), lambda i: (0, 0)),        # bias, VMEM-resident
        ],
        out_specs=pl.BlockSpec((TB, N_pad), lambda i: (i, 0)),
    )

    out_pad = pl.pallas_call(
        mlp_kernel,
        out_shape=jax.ShapeDtypeStruct((B_pad, N_pad), x.dtype),
        grid_spec=grid_spec,
        compiler_params=pltpu.CompilerParams(
            dimension_semantics=("parallel",),
            vmem_limit_bytes=vmem_limit,
        ),
        cost_estimate=cost,
    )(x_p, w1_p, w2_p, b2_p)

    # Slice away batch / lane padding.
    return out_pad[:B, :D_out]


def init_params(key, d_in, d_out):
    """Deterministic init matching the module's parameter shapes (stored as (in, out))."""
    k1, k2, k3 = jax.random.split(key, 3)
    w1 = jax.random.uniform(k1, (d_in, HIDDEN), jnp.float32,
                            minval=-1.0, maxval=1.0) / jnp.sqrt(d_in)
    w2 = jax.random.uniform(k2, (HIDDEN, d_out), jnp.float32,
                            minval=-1.0, maxval=1.0) / jnp.sqrt(HIDDEN)
    b2 = jax.random.uniform(k3, (1, d_out), jnp.float32,
                            minval=-1.0, maxval=1.0) / jnp.sqrt(HIDDEN)
    return w1, w2, b2


if __name__ == "__main__":
    key = jax.random.PRNGKey(0)
    kx, kp = jax.random.split(key)

    B, D_in, D_out = 8, 32, 10  # small MNIST-like shapes
    x = jax.random.normal(kx, (B, D_in), jnp.float32)
    w1, w2, b2 = init_params(kp, D_in, D_out)

    out = my_model_forward(x, w1, w2, b2)
    out = jax.block_until_ready(out)

    # Reference (f32) check; matmul inputs are bf16 in the kernel, so use a loose tol.
    ref = jnp.maximum(x @ w1, 0.0) @ w2 + b2
    assert out.shape == (B, D_out)
    assert jnp.allclose(out, ref, atol=2e-2, rtol=2e-2), (
        float(jnp.max(jnp.abs(out - ref))))

    print("KERNEL_OK")
</pallas_src>

<mosaic_0001>
module attributes {stable_mosaic.version = 11 : i64} {
  func.func @mlp_kernel(%arg0: i32, %arg1: memref<8x128xbf16, #tpu.memory_space<vmem>>, %arg2: memref<128x128xbf16, #tpu.memory_space<vmem>>, %arg3: memref<128x128xbf16, #tpu.memory_space<vmem>>, %arg4: memref<1x128xf32, #tpu.memory_space<vmem>>, %arg5: memref<8x128xf32, #tpu.memory_space<vmem>>) attributes {dimension_semantics = [#tpu.dimension_semantics<parallel>], iteration_bounds = array<i64: 1>, scalar_prefetch = 0 : i64, scratch_operands = 0 : i64, tpu.core_type = #tpu.core_type<tc>, window_params = [{transform_indices = @transform_0, window_bounds = array<i64: 8, 128>}, {pipeline_mode = #tpu.pipeline_mode<synchronous>, transform_indices = @transform_1, window_bounds = array<i64: 128, 128>}, {pipeline_mode = #tpu.pipeline_mode<synchronous>, transform_indices = @transform_2, window_bounds = array<i64: 128, 128>}, {pipeline_mode = #tpu.pipeline_mode<synchronous>, transform_indices = @transform_3, window_bounds = array<i64: 1, 128>}, {transform_indices = @transform_4, window_bounds = array<i64: 8, 128>}]} {
    %c0 = arith.constant 0 : index
    %c0_0 = arith.constant 0 : index
    %0 = vector.load %arg1[%c0, %c0_0] : memref<8x128xbf16, #tpu.memory_space<vmem>>, vector<8x128xbf16>
    %c0_1 = arith.constant 0 : index
    %c0_2 = arith.constant 0 : index
    %1 = vector.load %arg2[%c0_1, %c0_2] : memref<128x128xbf16, #tpu.memory_space<vmem>>, vector<128x128xbf16>
    %cst = arith.constant dense<0.000000e+00> : vector<8x128xf32>
    %2 = tpu.matmul %0, %1, %cst {dimension_numbers = #tpu.dot_dimension_numbers<[1], [0], [0], [1], [0, 0, 1, 1], [], []>} : vector<8x128xbf16>, vector<128x128xbf16>, vector<8x128xf32> -> vector<8x128xf32>
    %cst_3 = arith.constant 0.000000e+00 : f32
    %3 = vector.broadcast %cst_3 : f32 to vector<8x128xf32>
    %4 = arith.maximumf %2, %3 : vector<8x128xf32>
    %5 = arith.truncf %4 : vector<8x128xf32> to vector<8x128xbf16>
    %c0_4 = arith.constant 0 : index
    %c0_5 = arith.constant 0 : index
    %6 = vector.load %arg3[%c0_4, %c0_5] : memref<128x128xbf16, #tpu.memory_space<vmem>>, vector<128x128xbf16>
    %cst_6 = arith.constant dense<0.000000e+00> : vector<8x128xf32>
    %7 = tpu.matmul %5, %6, %cst_6 {dimension_numbers = #tpu.dot_dimension_numbers<[1], [0], [0], [1], [0, 0, 1, 1], [], []>} : vector<8x128xbf16>, vector<128x128xbf16>, vector<8x128xf32> -> vector<8x128xf32>
    %c0_7 = arith.constant 0 : index
    %c0_8 = arith.constant 0 : index
    %8 = vector.load %arg4[%c0_7, %c0_8] : memref<1x128xf32, #tpu.memory_space<vmem>>, vector<1x128xf32>
    %9 = vector.broadcast %8 : vector<1x128xf32> to vector<8x128xf32>
    %10 = arith.addf %7, %9 : vector<8x128xf32>
    %c0_9 = arith.constant 0 : index
    %c0_10 = arith.constant 0 : index
    %11 = vector.load %arg5[%c0_9, %c0_10] : memref<8x128xf32, #tpu.memory_space<vmem>>, vector<8x128xf32>
    tpu.vector_store %arg5[%c0_9, %c0_10], %10 {strides = array<i32>} : memref<8x128xf32, #tpu.memory_space<vmem>>, vector<8x128xf32>,
    return
  }
  func.func @transform_0(%arg0: i32) -> (i32, i32) {
    %c0_i32 = arith.constant 0 : i32
    %c0_i32_0 = arith.constant 0 : i32
    return %arg0, %c0_i32 : i32, i32
  }
  func.func @transform_1(%arg0: i32) -> (i32, i32) {
    %c0_i32 = arith.constant 0 : i32
    %c0_i32_0 = arith.constant 0 : i32
    %c0_i32_1 = arith.constant 0 : i32
    return %c0_i32, %c0_i32_0 : i32, i32
  }
  func.func @transform_2(%arg0: i32) -> (i32, i32) {
    %c0_i32 = arith.constant 0 : i32
    %c0_i32_0 = arith.constant 0 : i32
    %c0_i32_1 = arith.constant 0 : i32
    return %c0_i32, %c0_i32_0 : i32, i32
  }
  func.func @transform_3(%arg0: i32) -> (i32, i32) {
    %c0_i32 = arith.constant 0 : i32
    %c0_i32_0 = arith.constant 0 : i32
    %c0_i32_1 = arith.constant 0 : i32
    return %c0_i32, %c0_i32_0 : i32, i32
  }
  func.func @transform_4(%arg0: i32) -> (i32, i32) {
    %c0_i32 = arith.constant 0 : i32
    %c0_i32_0 = arith.constant 0 : i32
    return %arg0, %c0_i32 : i32, i32
  }
}

</mosaic_0001>

<llo_original>
// kernel: tpu_custom_call.1
$region0: #{tpu_custom_call.1}
  #allocation0 [shape = 'u32[]', space=smem, size = 0x4, offset = 0x4, fixed_abs, tag = 'smem constant byte address 0x4 - core index']
  #allocation1 [shape = 'u32[72,128]{1,0:T(1,128)}', space=vmem, size = 0x9000, scoped, tag = 'internal scratch']
  %s0 = inlined_call_operand.hbm [shape: bf16[8,128], index: 0, kind: input, shape index: {}]
  %s1 = inlined_call_operand.hbm [shape: bf16[128,128], index: 1, kind: input, shape index: {}]
  %s2 = inlined_call_operand.hbm [shape: bf16[128,128], index: 2, kind: input, shape index: {}]
  %s3 = inlined_call_operand.vmem [shape: f32[1,128], index: 3, kind: input, shape index: {}]
  %s4 = inlined_call_operand.hbm [shape: f32[8,128], index: 4, kind: output, shape index: {}]
  %s5 = sld [smem:[#allocation0]]
  $region38: #{tpu_custom_call.1} parent=0
    _
  %s7 = ssub.s32 1, %s5
  %s8 = scalar_select 0, %s7, %s5
  $region1: #{tpu_custom_call.1} parent=0
    #allocation2 [shape = 'u8[2048]{0}', space=vmem, size = 0x800, scoped, tag = 'input window, operand 0, single buffered']
    #allocation3 [shape = 's32[1]{0}', space=sflag, size = 0x4, scoped, tag = 'scoped memory for tpu_custom_call.1']
    #allocation4 [shape = 's32[1]{0}', space=sflag, size = 0x4, scoped, tag = 'scoped memory for tpu_custom_call.1']
    #allocation5 [shape = 'u8[32768]{0}', space=vmem, size = 0x8000, scoped, tag = 'input window, operand 1, single buffered']
    #allocation6 [shape = 's32[1]{0}', space=sflag, size = 0x4, scoped, tag = 'scoped memory for tpu_custom_call.1']
    #allocation7 [shape = 'u8[32768]{0}', space=vmem, size = 0x8000, scoped, tag = 'input window, operand 2, single buffered']
    #allocation8 [shape = 'u8[4096]{0}', space=vmem, size = 0x1000, scoped, tag = 'output window, operand 0, single buffered']
    %9 = vsyncpa [#allocation3], 0
    %10 = vsyncpa [#allocation6], 0
    %11 = vsyncpa [#allocation4], 0
    // Predicated region
    $region2: #{tpu_custom_call.1} parent=1 // pred_check
      _
    $region3: #{tpu_custom_call.1} parent=1 // pred_check_branch
      %13 = sbr.rel (0) target = $region5
    $region4: #{tpu_custom_call.1} parent=1 // pred_region
      %15 = vsyncadd [#allocation3], 0
      %s17 = sshll.u32 %s0, 4
      %s18 = int_to_ptr.hbm [resolvable:$true] %s17
      %s19 = sshll.u32 [#allocation2], 4
      %s20 = int_to_ptr.vmem [resolvable:$true] %s19
      %22 = dma.hbm_to_vmem [thread:$0]  %s18, 64, %s20, [#allocation3]
    $region5: #{tpu_custom_call.1} parent=1 // pred_fallthru
      _
    // Predicated region
    $region6: #{tpu_custom_call.1} parent=1 // pred_check
      _
    $region7: #{tpu_custom_call.1} parent=1 // pred_check_branch
      %24 = sbr.rel (0) target = $region9
    $region8: #{tpu_custom_call.1} parent=1 // pred_region
      %26 = vsyncadd [#allocation6], 0
      %s27 = sshll.u32 %s1, 4
      %s28 = int_to_ptr.hbm [resolvable:$true] %s27
      %s29 = sshll.u32 [#allocation5], 4
      %s30 = int_to_ptr.vmem [resolvable:$true] %s29
      %35 = dma.hbm_to_vmem [thread:$0]  %s28, 1024, %s30, [#allocation6], 64, 64, 4
    $region9: #{tpu_custom_call.1} parent=1 // pred_fallthru
      _
    // Predicated region
    $region10: #{tpu_custom_call.1} parent=1 // pred_check
      _
    $region11: #{tpu_custom_call.1} parent=1 // pred_check_branch
      %37 = sbr.rel (0) target = $region13
    $region12: #{tpu_custom_call.1} parent=1 // pred_region
      %39 = vsyncadd [#allocation6], 0
      %s40 = sshll.u32 %s2, 4
      %s41 = int_to_ptr.hbm [resolvable:$true] %s40
      %s42 = sshll.u32 [#allocation7], 4
      %s43 = int_to_ptr.vmem [resolvable:$true] %s42
      %48 = dma.hbm_to_vmem [thread:$0]  %s41, 1024, %s43, [#allocation6], 64, 64, 4
    $region13: #{tpu_custom_call.1} parent=1 // pred_fallthru
      _
    // Predicated region
    $region14: #{tpu_custom_call.1} parent=1 // pred_check
      _
    $region15: #{tpu_custom_call.1} parent=1 // pred_check_branch
      %50 = sbr.rel (0) target = $region17
    $region16: #{tpu_custom_call.1} parent=1 // pred_region
      _
    $region17: #{tpu_custom_call.1} parent=1 // pred_fallthru
      _
    // Predicated region
    $region18: #{tpu_custom_call.1} parent=1 // pred_check
      _
    $region19: #{tpu_custom_call.1} parent=1 // pred_check_branch
      %52 = sbr.rel (0) target = $region21
    $region20: #{tpu_custom_call.1} parent=1 // pred_region
      %54 = dma.done [#allocation3], 64
    $region21: #{tpu_custom_call.1} parent=1 // pred_fallthru
      _
    // Predicated region
    $region22: #{tpu_custom_call.1} parent=1 // pred_check
      _
    $region23: #{tpu_custom_call.1} parent=1 // pred_check_branch
      %56 = sbr.rel (0) target = $region25
    $region24: #{tpu_custom_call.1} parent=1 // pred_region
      %58 = dma.done [#allocation6], 1024
    $region25: #{tpu_custom_call.1} parent=1 // pred_fallthru
      _
    // Predicated region
    $region26: #{tpu_custom_call.1} parent=1 // pred_check
      _
    $region27: #{tpu_custom_call.1} parent=1 // pred_check_branch
      %60 = sbr.rel (0) target = $region29
    $region28: #{tpu_custom_call.1} parent=1 // pred_region
      %62 = dma.done [#allocation6], 1024
    $region29: #{tpu_custom_call.1} parent=1 // pred_fallthru
      _
    %v63 = vld [vmem:[#allocation2] sm:$0xf]
    %v64 = vld [vmem:[#allocation5] sm:$0xf]
    %v65 = vld [vmem:[#allocation5 + $0x4] sm:$0xf]
    %v66 = vld [vmem:[#allocation5 + $0x8] sm:$0xf]
    %v67 = vld [vmem:[#allocation5 + $0xc] sm:$0xf]
    %v68 = vld [vmem:[#allocation5 + $0x10] sm:$0xf]
    %v69 = vld [vmem:[#allocation5 + $0x14] sm:$0xf]
    %v70 = vld [vmem:[#allocation5 + $0x18] sm:$0xf]
    %v71 = vld [vmem:[#allocation5 + $0x1c] sm:$0xf]
    %v72 = vld [vmem:[#allocation5 + $0x20] sm:$0xf]
    %v73 = vld [vmem:[#allocation5 + $0x24] sm:$0xf]
    %v74 = vld [vmem:[#allocation5 + $0x28] sm:$0xf]
    %v75 = vld [vmem:[#allocation5 + $0x2c] sm:$0xf]
    %v76 = vld [vmem:[#allocation5 + $0x30] sm:$0xf]
    %v77 = vld [vmem:[#allocation5 + $0x34] sm:$0xf]
    %v78 = vld [vmem:[#allocation5 + $0x38] sm:$0xf]
    %v79 = vld [vmem:[#allocation5 + $0x3c] sm:$0xf]
    %v96 = vunpack.c.l.b16 %v64
    %v97 = vunpack.c.l.b16 %v65
    %v98 = vunpack.c.l.b16 %v66
    %v99 = vunpack.c.l.b16 %v67
    %v100 = vunpack.c.l.b16 %v68
    %v101 = vunpack.c.l.b16 %v69
    %v102 = vunpack.c.l.b16 %v70
    %v103 = vunpack.c.l.b16 %v71
    %v104 = vunpack.c.l.b16 %v72
    %v105 = vunpack.c.l.b16 %v73
    %v106 = vunpack.c.l.b16 %v74
    %v107 = vunpack.c.l.b16 %v75
    %v108 = vunpack.c.l.b16 %v76
    %v109 = vunpack.c.l.b16 %v77
    %v110 = vunpack.c.l.b16 %v78
    %v111 = vunpack.c.l.b16 %v79
    %v112 = vpack.c.b16 %v97, %v96
    %v113 = vpack.c.b16 %v99, %v98
    %v114 = vpack.c.b16 %v101, %v100
    %v115 = vpack.c.b16 %v103, %v102
    %v116 = vpack.c.b16 %v105, %v104
    %v117 = vpack.c.b16 %v107, %v106
    %v118 = vpack.c.b16 %v109, %v108
    %v119 = vpack.c.b16 %v111, %v110
    %128 = vmatpush.bf16.msra.mxu0 %v119
    %129 = vmatpush.bf16.msra.mxu0 %v118
    %130 = vmatpush.bf16.msra.mxu0 %v117
    %131 = vmatpush.bf16.msra.mxu0 %v116
    %132 = vmatpush.bf16.msra.mxu0 %v115
    %133 = vmatpush.bf16.msra.mxu0 %v114
    %134 = vmatpush.bf16.msra.mxu0 %v113
    %135 = vmatpush.bf16.msra.mxu0 %v112
    %136 = vmatmul.bf16.gmra.mxu0 %v63
    %v137 = vpop.f32.mrf.mxu0
    %v138 = vadd.f32 0.0, %v137
    %v139 = vpop.f32.mrf.mxu0
    %140 = vdwg.mxu0
    %v141 = vmax.f32 %v138, 0.0
    %v142 = vpack.c.bf16 %v141, %v141
    %v143 = vld [vmem:[#allocation7] sm:$0xf]
    %v144 = vld [vmem:[#allocation7 + $0x4] sm:$0xf]
    %v145 = vld [vmem:[#allocation7 + $0x8] sm:$0xf]
    %v146 = vld [vmem:[#allocation7 + $0xc] sm:$0xf]
    %v147 = vld [vmem:[#allocation7 + $0x10] sm:$0xf]
    %v148 = vld [vmem:[#allocation7 + $0x14] sm:$0xf]
    %v149 = vld [vmem:[#allocation7 + $0x18] sm:$0xf]
    %v150 = vld [vmem:[#allocation7 + $0x1c] sm:$0xf]
    %v151 = vld [vmem:[#allocation7 + $0x20] sm:$0xf]
    %v152 = vld [vmem:[#allocation7 + $0x24] sm:$0xf]
    %v153 = vld [vmem:[#allocation7 + $0x28] sm:$0xf]
    %v154 = vld [vmem:[#allocation7 + $0x2c] sm:$0xf]
    %v155 = vld [vmem:[#allocation7 + $0x30] sm:$0xf]
    %v156 = vld [vmem:[#allocation7 + $0x34] sm:$0xf]
    %v157 = vld [vmem:[#allocation7 + $0x38] sm:$0xf]
    %v158 = vld [vmem:[#allocation7 + $0x3c] sm:$0xf]
    %v159 = vld [vmem:[%s3] sm:$0x1]
    %v161 = vperm.slane %v159, 0
    %v179 = vunpack.c.l.b16 %v143
    %v180 = vunpack.c.l.b16 %v144
    %v181 = vunpack.c.l.b16 %v145
    %v182 = vunpack.c.l.b16 %v146
    %v183 = vunpack.c.l.b16 %v147
    %v184 = vunpack.c.l.b16 %v148
    %v185 = vunpack.c.l.b16 %v149
    %v186 = vunpack.c.l.b16 %v150
    %v187 = vunpack.c.l.b16 %v151
    %v188 = vunpack.c.l.b16 %v152
    %v189 = vunpack.c.l.b16 %v153
    %v190 = vunpack.c.l.b16 %v154
    %v191 = vunpack.c.l.b16 %v155
    %v192 = vunpack.c.l.b16 %v156
    %v193 = vunpack.c.l.b16 %v157
    %v194 = vunpack.c.l.b16 %v158
    %v195 = vpack.c.b16 %v180, %v179
    %v196 = vpack.c.b16 %v182, %v181
    %v197 = vpack.c.b16 %v184, %v183
    %v198 = vpack.c.b16 %v186, %v185
    %v199 = vpack.c.b16 %v188, %v187
    %v200 = vpack.c.b16 %v190, %v189
    %v201 = vpack.c.b16 %v192, %v191
    %v202 = vpack.c.b16 %v194, %v193
    %211 = vmatpush.bf16.msra.mxu0 %v202
    %212 = vmatpush.bf16.msra.mxu0 %v201
    %213 = vmatpush.bf16.msra.mxu0 %v200
    %214 = vmatpush.bf16.msra.mxu0 %v199
    %215 = vmatpush.bf16.msra.mxu0 %v198
    %216 = vmatpush.bf16.msra.mxu0 %v197
    %217 = vmatpush.bf16.msra.mxu0 %v196
    %218 = vmatpush.bf16.msra.mxu0 %v195
    %219 = vmatmul.bf16.gmra.mxu0 %v142
    %v220 = vpop.f32.mrf.mxu0
    %v221 = vadd.f32 %v161, %v220
    %v222 = vpop.f32.mrf.mxu0
    %223 = vdwg.mxu0
    %224 = vst [vmem:[#allocation8] sm:$0xff] %v221
    // Predicated region
    $region30: #{tpu_custom_call.1} parent=1 // pred_check
      _
    $region31: #{tpu_custom_call.1} parent=1 // pred_check_branch
      %226 = sbr.rel (0) target = $region33
    $region32: #{tpu_custom_call.1} parent=1 // pred_region
      %228 = vsyncadd [#allocation4], 0
      %s230 = sshll.u32 [#allocation8], 4
      %s231 = int_to_ptr.vmem [resolvable:$true] %s230
      %s232 = sshll.u32 %s4, 4
      %s233 = int_to_ptr.hbm [resolvable:$true] %s232
      %235 = dma.vmem_to_hbm [thread:$0]  %s231, 128, %s233, [#allocation4]
    $region33: #{tpu_custom_call.1} parent=1 // pred_fallthru
      _
    // Predicated region
    $region34: #{tpu_custom_call.1} parent=1 // pred_check
      _
    $region35: #{tpu_custom_call.1} parent=1 // pred_check_branch
      %237 = sbr.rel (0) target = $region37
    $region36: #{tpu_custom_call.1} parent=1 // pred_region
      %239 = dma.done [#allocation4], 128
    $region37: #{tpu_custom_call.1} parent=1 // pred_fallthru
      _
    %240 = vsyncpa [#allocation3], 1
    %241 = vsyncpa [#allocation6], 1
    %242 = vsyncpa [#allocation4], 1

</llo_original>
